<compile_context>
chip_gen: v6e
topology: v6e:2x2x1
jax: 0.10.0
libtpu: 0.0.40
codegen_flags: <defaults>
</compile_context>

<pallas_src>
import numpy as np
import jax
import jax.numpy as jnp
from jax.experimental import pallas as pl
from jax.experimental.pallas import tpu as pltpu


def _round_up(n, m):
    return ((n + m - 1) // m) * m


def _sublane_multiple(dtype):
    # sublane packing: f32 -> 8, bf16/f16 -> 16, int8/fp8 -> 32
    return {4: 8, 2: 16, 1: 32}.get(jnp.dtype(dtype).itemsize, 8)


def aftnn_kernel(x_ref, beta_ref, o_ref):
    x = x_ref[...].astype(jnp.float32)              # (tb, D), in-kernel upcast
    beta = beta_ref[...]                            # (1, D) f32, VMEM-resident
    # row-wise <beta, x>: VPU multiply + XLU lane-reduce, then EUP exp.
    s = jnp.sum(x * beta, axis=-1, keepdims=True)   # (tb, 1) f32
    o_ref[...] = jnp.exp(s)


def aftnn_forward(x, beta, pre_k, *, target_block_bytes=4 << 20):
    """x: (B, D_in) any float dtype. beta: (D_in,). pre_k: scalar/(1,). Returns (B, 2) f32."""
    B, D = x.shape
    itemsize = jnp.dtype(x.dtype).itemsize
    sub = _sublane_multiple(x.dtype)

    # Batch tile sized by bytes (~4 MiB of x per grid step), multiple of the
    # sublane pack for x's dtype.
    tb = max(sub, (target_block_bytes // (D * itemsize)) // sub * sub)
    # Keep >= ~4 grid steps when B is large so v7x megacore has work for both TCs.
    if B > 4 * sub:
        tb = min(tb, _round_up(pl.cdiv(B, 4), sub))
    if tb >= B:
        tb = B  # single block == full array dims (no divisibility constraint)

    grid = (pl.cdiv(B, tb),)
    beta2d = jnp.asarray(beta, jnp.float32).reshape(1, D)

    expbetax = pl.pallas_call(
        aftnn_kernel,
        out_shape=jax.ShapeDtypeStruct((B, 1), jnp.float32),
        grid_spec=pltpu.PrefetchScalarGridSpec(
            num_scalar_prefetch=0,
            grid=grid,
            in_specs=[
                pl.BlockSpec((tb, D), lambda i: (i, 0)),   # x: tiled over batch
                pl.BlockSpec((1, D), lambda i: (0, 0)),    # beta: resident in VMEM
            ],
            out_specs=pl.BlockSpec((tb, 1), lambda i: (i, 0)),
        ),
        compiler_params=pltpu.CompilerParams(
            dimension_semantics=("parallel",)),            # v7x megacore sharding
    )(x, beta2d)

    # pre_k column assembled outside the kernel (tiny (B, 2) XLA op).
    prek_col = jnp.broadcast_to(
        jnp.asarray(pre_k, jnp.float32).reshape(1, 1), (B, 1))
    return jnp.concatenate([expbetax, prek_col], axis=1)


def aftnn_reference(x, beta, pre_k):
    """Pure-JAX reference of AFTNN.forward."""
    beta = jnp.asarray(beta, jnp.float32)
    expbetax = jnp.exp(jnp.sum(beta * x, axis=-1, keepdims=True)).astype(jnp.float32)
    prek_col = jnp.broadcast_to(
        jnp.asarray(pre_k, jnp.float32).reshape(1, 1), (x.shape[0], 1))
    return jnp.concatenate([expbetax, prek_col], axis=1)


if __name__ == "__main__":
    key = jax.random.PRNGKey(0)
    kx, kb, kx2, kx3 = jax.random.split(key, 4)

    D_in = 32
    # Scale inputs so exp() stays well-conditioned for the tolerance check.
    beta = 0.1 * jax.random.normal(kb, (D_in,), jnp.float32)   # ~ nn.Parameter(torch.randn(D_in))
    pre_k = jnp.array([1.0], jnp.float32)                      # nn.Parameter(torch.tensor([1.0]))

    # 1) Small f32 batch, single block.
    x = 0.1 * jax.random.normal(kx, (8, D_in), jnp.float32)
    out = jax.block_until_ready(aftnn_forward(x, beta, pre_k))
    np.testing.assert_allclose(np.asarray(out), np.asarray(aftnn_reference(x, beta, pre_k)),
                               rtol=1e-5, atol=1e-6)

    # 2) Ragged multi-step grid (tiny tile forced so B doesn't divide tb).
    x2 = 0.1 * jax.random.normal(kx2, (100, D_in), jnp.float32)
    out2 = jax.block_until_ready(aftnn_forward(x2, beta, pre_k, target_block_bytes=1024))
    np.testing.assert_allclose(np.asarray(out2), np.asarray(aftnn_reference(x2, beta, pre_k)),
                               rtol=1e-5, atol=1e-6)

    # 3) Native bf16 input path (no wrapper cast; in-kernel f32 upcast).
    x3 = (0.1 * jax.random.normal(kx3, (40, D_in), jnp.float32)).astype(jnp.bfloat16)
    out3 = jax.block_until_ready(aftnn_forward(x3, beta, pre_k, target_block_bytes=2048))
    np.testing.assert_allclose(np.asarray(out3), np.asarray(aftnn_reference(x3, beta, pre_k)),
                               rtol=1e-5, atol=1e-6)

    print("KERNEL_OK")
</pallas_src>

<mosaic_0001>
module attributes {stable_mosaic.version = 11 : i64} {
  func.func @aftnn_kernel(%arg0: i32, %arg1: memref<8x32xf32, #tpu.memory_space<vmem>>, %arg2: memref<1x32xf32, #tpu.memory_space<vmem>>, %arg3: memref<8x1xf32, #tpu.memory_space<vmem>>) attributes {dimension_semantics = [#tpu.dimension_semantics<parallel>], iteration_bounds = array<i64: 1>, scalar_prefetch = 0 : i64, scratch_operands = 0 : i64, tpu.core_type = #tpu.core_type<tc>, window_params = [{transform_indices = @transform_0, window_bounds = array<i64: 8, 32>}, {pipeline_mode = #tpu.pipeline_mode<synchronous>, transform_indices = @transform_1, window_bounds = array<i64: 1, 32>}, {transform_indices = @transform_2, window_bounds = array<i64: 8, 1>}]} {
    %c0 = arith.constant 0 : index
    %c0_0 = arith.constant 0 : index
    %0 = vector.load %arg1[%c0, %c0_0] : memref<8x32xf32, #tpu.memory_space<vmem>>, vector<8x32xf32>
    %c0_1 = arith.constant 0 : index
    %c0_2 = arith.constant 0 : index
    %1 = vector.load %arg2[%c0_1, %c0_2] : memref<1x32xf32, #tpu.memory_space<vmem>>, vector<1x32xf32>
    %2 = vector.broadcast %1 : vector<1x32xf32> to vector<8x32xf32>
    %3 = arith.mulf %0, %2 : vector<8x32xf32>
    %cst = arith.constant dense<0.000000e+00> : vector<8xf32>
    %4 = vector.multi_reduction <add>, %3, %cst [1] : vector<8x32xf32> to vector<8xf32>
    %5 = vector.shape_cast %4 : vector<8xf32> to vector<8x1xf32>
    %6 = math.exp %5 : vector<8x1xf32>
    %c0_3 = arith.constant 0 : index
    %c0_4 = arith.constant 0 : index
    %7 = vector.load %arg3[%c0_3, %c0_4] : memref<8x1xf32, #tpu.memory_space<vmem>>, vector<8x1xf32>
    tpu.vector_store %arg3[%c0_3, %c0_4], %6 {strides = array<i32>} : memref<8x1xf32, #tpu.memory_space<vmem>>, vector<8x1xf32>,
    return
  }
  func.func @transform_0(%arg0: i32) -> (i32, i32) {
    %c0_i32 = arith.constant 0 : i32
    %c0_i32_0 = arith.constant 0 : i32
    return %arg0, %c0_i32 : i32, i32
  }
  func.func @transform_1(%arg0: i32) -> (i32, i32) {
    %c0_i32 = arith.constant 0 : i32
    %c0_i32_0 = arith.constant 0 : i32
    %c0_i32_1 = arith.constant 0 : i32
    return %c0_i32, %c0_i32_0 : i32, i32
  }
  func.func @transform_2(%arg0: i32) -> (i32, i32) {
    %c0_i32 = arith.constant 0 : i32
    %c0_i32_0 = arith.constant 0 : i32
    return %arg0, %c0_i32 : i32, i32
  }
}

</mosaic_0001>

<llo_original>
// kernel: tpu_custom_call.1
$region0: #{tpu_custom_call.1}
  #allocation0 [shape = 'u32[]', space=smem, size = 0x4, offset = 0x4, fixed_abs, tag = 'smem constant byte address 0x4 - core index']
  #allocation1 [shape = 'u32[144,128]{1,0:T(1,128)}', space=vmem, size = 0x12000, scoped, tag = 'internal scratch']
  %s0 = inlined_call_operand.hbm [shape: f32[8,32], index: 0, kind: input, shape index: {}]
  %s1 = inlined_call_operand.vmem [shape: f32[1,32], index: 1, kind: input, shape index: {}]
  %s2 = inlined_call_operand.vmem [shape: f32[8,1], index: 2, kind: output, shape index: {}]
  %s3 = sld [smem:[#allocation0]]
  $region22: #{tpu_custom_call.1} parent=0
    _
  %s5 = ssub.s32 1, %s3
  %s6 = scalar_select 0, %s5, %s3
  $region1: #{tpu_custom_call.1} parent=0
    #allocation2 [shape = 'u8[4096]{0}', space=vmem, size = 0x1000, scoped, tag = 'input window, operand 0, single buffered']
    #allocation3 [shape = 's32[1]{0}', space=sflag, size = 0x4, scoped, tag = 'scoped memory for tpu_custom_call.1']
    %7 = vsyncpa [#allocation3], 0
    // Predicated region
    $region2: #{tpu_custom_call.1} parent=1 // pred_check
      _
    $region3: #{tpu_custom_call.1} parent=1 // pred_check_branch
      %9 = sbr.rel (0) target = $region5
    $region4: #{tpu_custom_call.1} parent=1 // pred_region
      %s11 = ssub.s32 128, 128
      %12 = vsyncadd [#allocation3], %s11
      %s14 = sshll.u32 [#allocation2], 4
      %s15 = int_to_ptr.vmem [resolvable:$true] %s14
      %17 = dma.hbm_to_vmem [thread:$0]  %s0, 128, %s15, [#allocation3]
    $region5: #{tpu_custom_call.1} parent=1 // pred_fallthru
      _
    // Predicated region
    $region6: #{tpu_custom_call.1} parent=1 // pred_check
      _
    $region7: #{tpu_custom_call.1} parent=1 // pred_check_branch
      %19 = sbr.rel (0) target = $region9
    $region8: #{tpu_custom_call.1} parent=1 // pred_region
      _
    $region9: #{tpu_custom_call.1} parent=1 // pred_fallthru
      _
    // Predicated region
    $region10: #{tpu_custom_call.1} parent=1 // pred_check
      _
    $region11: #{tpu_custom_call.1} parent=1 // pred_check_branch
      %21 = sbr.rel (0) target = $region13
    $region12: #{tpu_custom_call.1} parent=1 // pred_region
      %22 = dma.done [#allocation3], 128
    $region13: #{tpu_custom_call.1} parent=1 // pred_fallthru
      _
    %v23 = vld [vmem:[#allocation2] sm:$0xff]
    %v24 = vld [vmem:[%s1] sm:$0x1]
    %v26 = vlaneseq
    %v27 = vshrl.u32 %v26, 7
    %v28 = vsub.s32 0, %v27
    %v29 = vrot.slane %v24, %v28
    %v31 = vmul.f32 %v23, %v29
    %vm32 = vcmask 261120
    %v33 = vsel %vm32, %v31, 0.0
    %34 = vadd.xlane.f32.xlu0 %v33
    %v35 = vpop.xlane.xlu0 %34
    %v36 = vmul.f32 %v35, 1.442695
    %v37 = vpow.pop %v36
    %vm38 = vcmask 7168
    %39 = vst.msk [vmem:[%s2] sm:$0xff] %vm38, %v37
    // Predicated region
    $region14: #{tpu_custom_call.1} parent=1 // pred_check
      _
    $region15: #{tpu_custom_call.1} parent=1 // pred_check_branch
      %41 = sbr.rel (0) target = $region17
    $region16: #{tpu_custom_call.1} parent=1 // pred_region
      _
    $region17: #{tpu_custom_call.1} parent=1 // pred_fallthru
      _
    // Predicated region
    $region18: #{tpu_custom_call.1} parent=1 // pred_check
      _
    $region19: #{tpu_custom_call.1} parent=1 // pred_check_branch
      %43 = sbr.rel (0) target = $region21
    $region20: #{tpu_custom_call.1} parent=1 // pred_region
      _
    $region21: #{tpu_custom_call.1} parent=1 // pred_fallthru
      _
    %44 = vsyncpa [#allocation3], 1

</llo_original>
